<compile_context>
chip_gen: v5e
topology: v5e:2x2
jax: 0.10.0
libtpu: 0.0.40
codegen_flags: <defaults>
</compile_context>

<pallas_src>
import jax
import jax.numpy as jnp
from jax import lax
from jax.experimental import pallas as pl
from jax.experimental.pallas import tpu as pltpu


def attention_kernel(enc_ref,      # VMEM (bb*S, H)  flattened encoder rows
                     cov2_ref,     # VMEM (bb, S)    coverage, lane-dense
                     cov3_ref,     # VMEM (bb, S, 1) coverage, sublane layout
                     dec_ref,      # VMEM (bb, 1, H) dec @ W1_dec + b1
                     lens_ref,     # VMEM (bb, 1)    int32 text lengths
                     wenc_ref,     # VMEM (H, H)     encoder block of W1
                     wcov_ref,     # VMEM (1, 1, H)  colsum of coverage block of W1
                     vw_ref,       # VMEM (1, 1, H)  v weight row
                     attn_ref,     # VMEM out (bb, S)
                     cov_out_ref): # VMEM out (bb, S)
    bb, S = cov2_ref.shape
    H = enc_ref.shape[-1]

    # Encoder projection: one MXU matmul over the whole batch block.
    proj = jnp.dot(enc_ref[...], wenc_ref[...],
                   preferred_element_type=jnp.float32)          # (bb*S, H)
    proj = proj.reshape(bb, S, H)

    # dec term (Linear bias already folded in) broadcasts over the S sublanes;
    # coverage term is rank-1: cov(bb,S,1) * colsum(W1_cov)(1,1,H) — no matmul.
    pre = proj + dec_ref[...] + cov3_ref[...] * wcov_ref[...]   # (bb, S, H)
    h = jnp.tanh(pre)

    # v-projection as VPU multiply + lane reduction -> lane-dense (bb, S).
    # (v bias omitted: softmax is invariant to adding a constant to all scores.)
    scores = jnp.sum(h * vw_ref[...], axis=2)                   # (bb, S)

    # Mask positions >= text_lengths[b] (matches reference; a zero-length row
    # would produce NaN exactly like the PyTorch module does).
    idx = lax.broadcasted_iota(jnp.int32, (bb, S), 1)
    scores = jnp.where(idx >= lens_ref[...], -jnp.inf, scores)

    # Softmax along the lane (sequence) axis; EUP approximate reciprocal for
    # the per-row normalization.
    m = jnp.max(scores, axis=-1, keepdims=True)                 # (bb, 1)
    e = jnp.exp(scores - m)                                     # (bb, S)
    denom = jnp.sum(e, axis=-1, keepdims=True)                  # (bb, 1)
    w = e * pl.reciprocal(denom, approx=True)                   # (bb, S)

    attn_ref[...] = w
    cov_out_ref[...] = cov2_ref[...] + w


def attention_forward(dec_input, enc_output, text_lengths, coverage_vector,
                      params, *, row_target=512):
    """dec_input (B,1,E) f32, enc_output (B,S,H) f32, text_lengths (B,) int,
    coverage_vector (B,S) f32. Returns (attn_weights (B,S), new_coverage (B,S))."""
    W1, b1, Vw, Vb = params
    B, S, H = enc_output.shape
    E = dec_input.shape[-1]

    # ---- one-time weight / activation prep in plain XLA (outside the kernel) ----
    W_enc = W1[:H]                                   # (H, H)   encoder block
    W_dec = W1[H:H + E]                              # (E, H)   decoder block
    wcov3 = jnp.sum(W1[H + E:], axis=0).reshape(1, 1, H)   # colsum of coverage block
    dec_proj = (dec_input[:, 0, :] @ W_dec + b1)[:, None, :]  # (B, 1, H), bias folded in
    vw3 = Vw.reshape(1, 1, H)
    # NOTE: Vb (v bias) shifts every score by a constant; softmax is
    # shift-invariant, so it does not affect the outputs and is dropped.

    enc_flat = enc_output.reshape(B * S, H)          # free layout plumbing
    cov3 = coverage_vector[..., None]                # (B, S, 1) sublane layout
    lens2 = text_lengths.astype(jnp.int32).reshape(B, 1)

    # Batch-block size: aim for ~row_target rows per grid step (amortizes the
    # per-step pipeline overhead and fills the MXU), constrained to divide B.
    bb = max(1, min(B, row_target // max(S, 1)))
    while B % bb:
        bb -= 1
    nb = B // bb

    attn, cov_new = pl.pallas_call(
        attention_kernel,
        grid=(nb,),
        in_specs=[
            pl.BlockSpec((bb * S, H), lambda i: (i, 0)),      # enc rows (flattened)
            pl.BlockSpec((bb, S), lambda i: (i, 0)),          # coverage, lane-dense
            pl.BlockSpec((bb, S, 1), lambda i: (i, 0, 0)),    # coverage, sublane
            pl.BlockSpec((bb, 1, H), lambda i: (i, 0, 0)),    # dec projection
            pl.BlockSpec((bb, 1), lambda i: (i, 0)),          # lengths
            pl.BlockSpec((H, H), lambda i: (0, 0)),           # W_enc (resident)
            pl.BlockSpec((1, 1, H), lambda i: (0, 0, 0)),     # colsum(W_cov)
            pl.BlockSpec((1, 1, H), lambda i: (0, 0, 0)),     # v weight row
        ],
        out_specs=[
            pl.BlockSpec((bb, S), lambda i: (i, 0)),
            pl.BlockSpec((bb, S), lambda i: (i, 0)),
        ],
        out_shape=(jax.ShapeDtypeStruct((B, S), jnp.float32),
                   jax.ShapeDtypeStruct((B, S), jnp.float32)),
        compiler_params=pltpu.CompilerParams(
            dimension_semantics=("parallel",)),
    )(enc_flat, coverage_vector, cov3, dec_proj, lens2, W_enc, wcov3, vw3)

    return attn, cov_new


def reference_forward(dec_input, enc_output, text_lengths, coverage_vector, params):
    """Pure-JAX reference matching the PyTorch forward exactly."""
    W1, b1, Vw, Vb = params
    B, S, H = enc_output.shape
    dec_rep = jnp.broadcast_to(dec_input, (B, S, dec_input.shape[-1]))
    cov_rep = jnp.broadcast_to(coverage_vector[..., None], (B, S, H))
    x = jnp.concatenate([enc_output, dec_rep, cov_rep], axis=-1)
    h = jnp.tanh(x @ W1 + b1)
    scores = (h @ Vw.reshape(H, 1))[..., 0] + Vb
    mask = jnp.arange(S)[None, :] >= text_lengths[:, None]
    scores = jnp.where(mask, -jnp.inf, scores)
    w = jax.nn.softmax(scores, axis=-1)
    return w, coverage_vector + w


if __name__ == "__main__":
    # config.hidden_size = 32, config.emb_size = 16  (small synthetic sizes)
    B, S, H, E = 2, 8, 32, 16
    C = 2 * H + E

    key = jax.random.PRNGKey(0)
    k_enc, k_dec, k_cov, k_w1, k_b1, k_vw, k_vb = jax.random.split(key, 7)

    enc_output = jax.random.normal(k_enc, (B, S, H), dtype=jnp.float32)
    dec_input = jax.random.normal(k_dec, (B, 1, E), dtype=jnp.float32)
    coverage = jax.random.uniform(k_cov, (B, S), dtype=jnp.float32)
    text_lengths = jnp.array([5, 8], dtype=jnp.int32)

    # Deterministic parameter init (W stored as (in, out) == torch weight.T).
    scale1 = 1.0 / jnp.sqrt(jnp.float32(C))
    scale2 = 1.0 / jnp.sqrt(jnp.float32(H))
    W1 = jax.random.uniform(k_w1, (C, H), jnp.float32, -scale1, scale1)
    b1 = jax.random.uniform(k_b1, (H,), jnp.float32, -scale1, scale1)
    Vw = jax.random.uniform(k_vw, (H,), jnp.float32, -scale2, scale2)
    Vb = jax.random.uniform(k_vb, (), jnp.float32, -scale2, scale2)
    params = (W1, b1, Vw, Vb)

    attn_w, new_cov = jax.jit(attention_forward)(
        dec_input, enc_output, text_lengths, coverage, params)
    jax.block_until_ready((attn_w, new_cov))

    # Sanity check against pure-JAX reference (tolerance accounts for the EUP
    # approximate reciprocal used in the softmax normalization).
    ref_w, ref_cov = reference_forward(dec_input, enc_output, text_lengths,
                                       coverage, params)
    assert jnp.allclose(attn_w, ref_w, atol=1e-3, rtol=1e-3), \
        float(jnp.max(jnp.abs(attn_w - ref_w)))
    assert jnp.allclose(new_cov, ref_cov, atol=1e-3, rtol=1e-3), \
        float(jnp.max(jnp.abs(new_cov - ref_cov)))

    print("KERNEL_OK")
</pallas_src>

<mosaic_0001>
module attributes {stable_mosaic.version = 11 : i64} {
  func.func @attention_kernel(%arg0: i32, %arg1: memref<16x32xf32, #tpu.memory_space<vmem>>, %arg2: memref<2x8xf32, #tpu.memory_space<vmem>>, %arg3: memref<2x8x1xf32, #tpu.memory_space<vmem>>, %arg4: memref<2x1x32xf32, #tpu.memory_space<vmem>>, %arg5: memref<2x1xi32, #tpu.memory_space<vmem>>, %arg6: memref<32x32xf32, #tpu.memory_space<vmem>>, %arg7: memref<1x1x32xf32, #tpu.memory_space<vmem>>, %arg8: memref<1x1x32xf32, #tpu.memory_space<vmem>>, %arg9: memref<2x8xf32, #tpu.memory_space<vmem>>, %arg10: memref<2x8xf32, #tpu.memory_space<vmem>>) attributes {dimension_semantics = [#tpu.dimension_semantics<parallel>], iteration_bounds = array<i64: 1>, scalar_prefetch = 0 : i64, scratch_operands = 0 : i64, tpu.core_type = #tpu.core_type<tc>, window_params = [{transform_indices = @transform_0, window_bounds = array<i64: 16, 32>}, {transform_indices = @transform_1, window_bounds = array<i64: 2, 8>}, {transform_indices = @transform_2, window_bounds = array<i64: 2, 8, 1>}, {transform_indices = @transform_3, window_bounds = array<i64: 2, 1, 32>}, {transform_indices = @transform_4, window_bounds = array<i64: 2, 1>}, {pipeline_mode = #tpu.pipeline_mode<synchronous>, transform_indices = @transform_5, window_bounds = array<i64: 32, 32>}, {pipeline_mode = #tpu.pipeline_mode<synchronous>, transform_indices = @transform_6, window_bounds = array<i64: 1, 1, 32>}, {pipeline_mode = #tpu.pipeline_mode<synchronous>, transform_indices = @transform_7, window_bounds = array<i64: 1, 1, 32>}, {transform_indices = @transform_8, window_bounds = array<i64: 2, 8>}, {transform_indices = @transform_9, window_bounds = array<i64: 2, 8>}]} {
    %c0 = arith.constant 0 : index
    %c0_0 = arith.constant 0 : index
    %0 = vector.load %arg1[%c0, %c0_0] : memref<16x32xf32, #tpu.memory_space<vmem>>, vector<16x32xf32>
    %c0_1 = arith.constant 0 : index
    %c0_2 = arith.constant 0 : index
    %1 = vector.load %arg6[%c0_1, %c0_2] : memref<32x32xf32, #tpu.memory_space<vmem>>, vector<32x32xf32>
    %cst = arith.constant dense<0.000000e+00> : vector<16x32xf32>
    %2 = tpu.matmul %0, %1, %cst {dimension_numbers = #tpu.dot_dimension_numbers<[1], [0], [0], [1], [0, 0, 1, 1], [], []>} : vector<16x32xf32>, vector<32x32xf32>, vector<16x32xf32> -> vector<16x32xf32>
    %3 = vector.shape_cast %2 : vector<16x32xf32> to vector<2x8x32xf32>
    %c0_3 = arith.constant 0 : index
    %c0_4 = arith.constant 0 : index
    %c0_5 = arith.constant 0 : index
    %4 = vector.load %arg4[%c0_3, %c0_4, %c0_5] : memref<2x1x32xf32, #tpu.memory_space<vmem>>, vector<2x1x32xf32>
    %5 = vector.broadcast %4 : vector<2x1x32xf32> to vector<2x8x32xf32>
    %6 = arith.addf %3, %5 : vector<2x8x32xf32>
    %c0_6 = arith.constant 0 : index
    %c0_7 = arith.constant 0 : index
    %c0_8 = arith.constant 0 : index
    %7 = vector.load %arg3[%c0_6, %c0_7, %c0_8] : memref<2x8x1xf32, #tpu.memory_space<vmem>>, vector<2x8x1xf32>
    %c0_9 = arith.constant 0 : index
    %c0_10 = arith.constant 0 : index
    %c0_11 = arith.constant 0 : index
    %8 = vector.load %arg7[%c0_9, %c0_10, %c0_11] : memref<1x1x32xf32, #tpu.memory_space<vmem>>, vector<1x1x32xf32>
    %9 = vector.broadcast %7 : vector<2x8x1xf32> to vector<2x8x32xf32>
    %10 = vector.broadcast %8 : vector<1x1x32xf32> to vector<2x8x32xf32>
    %11 = arith.mulf %9, %10 : vector<2x8x32xf32>
    %12 = arith.addf %6, %11 : vector<2x8x32xf32>
    %13 = math.tanh %12 : vector<2x8x32xf32>
    %c0_12 = arith.constant 0 : index
    %c0_13 = arith.constant 0 : index
    %c0_14 = arith.constant 0 : index
    %14 = vector.load %arg8[%c0_12, %c0_13, %c0_14] : memref<1x1x32xf32, #tpu.memory_space<vmem>>, vector<1x1x32xf32>
    %15 = vector.broadcast %14 : vector<1x1x32xf32> to vector<2x8x32xf32>
    %16 = arith.mulf %13, %15 : vector<2x8x32xf32>
    %cst_15 = arith.constant dense<0.000000e+00> : vector<2x8xf32>
    %17 = vector.multi_reduction <add>, %16, %cst_15 [2] : vector<2x8x32xf32> to vector<2x8xf32>
    %18 = tpu.iota {dimensions = array<i32: 1>} : vector<2x8xi32>
    %c0_16 = arith.constant 0 : index
    %c0_17 = arith.constant 0 : index
    %19 = vector.load %arg5[%c0_16, %c0_17] : memref<2x1xi32, #tpu.memory_space<vmem>>, vector<2x1xi32>
    %20 = vector.broadcast %19 : vector<2x1xi32> to vector<2x8xi32>
    %21 = arith.cmpi sge, %18, %20 : vector<2x8xi32>
    %cst_18 = arith.constant 0xFF800000 : f32
    %22 = vector.broadcast %cst_18 : f32 to vector<2x8xf32>
    %23 = arith.select %21, %22, %17 : vector<2x8xi1>, vector<2x8xf32>
    %cst_19 = arith.constant dense<0xFF800000> : vector<2xf32>
    %24 = vector.multi_reduction <maximumf>, %23, %cst_19 [1] : vector<2x8xf32> to vector<2xf32>
    %25 = vector.shape_cast %24 : vector<2xf32> to vector<2x1xf32>
    %26 = vector.broadcast %25 : vector<2x1xf32> to vector<2x8xf32>
    %27 = arith.subf %23, %26 : vector<2x8xf32>
    %28 = math.exp %27 : vector<2x8xf32>
    %cst_20 = arith.constant dense<0.000000e+00> : vector<2xf32>
    %29 = vector.multi_reduction <add>, %28, %cst_20 [1] : vector<2x8xf32> to vector<2xf32>
    %30 = vector.shape_cast %29 : vector<2xf32> to vector<2x1xf32>
    %31 = tpu.reciprocal %30 {approx = true} : vector<2x1xf32> -> vector<2x1xf32>
    %32 = vector.broadcast %31 : vector<2x1xf32> to vector<2x8xf32>
    %33 = arith.mulf %28, %32 : vector<2x8xf32>
    %c0_21 = arith.constant 0 : index
    %c0_22 = arith.constant 0 : index
    %34 = vector.load %arg9[%c0_21, %c0_22] : memref<2x8xf32, #tpu.memory_space<vmem>>, vector<2x8xf32>
    tpu.vector_store %arg9[%c0_21, %c0_22], %33 {strides = array<i32>} : memref<2x8xf32, #tpu.memory_space<vmem>>, vector<2x8xf32>,
    %c0_23 = arith.constant 0 : index
    %c0_24 = arith.constant 0 : index
    %35 = vector.load %arg2[%c0_23, %c0_24] : memref<2x8xf32, #tpu.memory_space<vmem>>, vector<2x8xf32>
    %36 = arith.addf %35, %33 : vector<2x8xf32>
    %c0_25 = arith.constant 0 : index
    %c0_26 = arith.constant 0 : index
    %37 = vector.load %arg10[%c0_25, %c0_26] : memref<2x8xf32, #tpu.memory_space<vmem>>, vector<2x8xf32>
    tpu.vector_store %arg10[%c0_25, %c0_26], %36 {strides = array<i32>} : memref<2x8xf32, #tpu.memory_space<vmem>>, vector<2x8xf32>,
    return
  }
  func.func @transform_0(%arg0: i32) -> (i32, i32) {
    %c0_i32 = arith.constant 0 : i32
    %c0_i32_0 = arith.constant 0 : i32
    return %arg0, %c0_i32 : i32, i32
  }
  func.func @transform_1(%arg0: i32) -> (i32, i32) {
    %c0_i32 = arith.constant 0 : i32
    %c0_i32_0 = arith.constant 0 : i32
    return %arg0, %c0_i32 : i32, i32
  }
  func.func @transform_2(%arg0: i32) -> (i32, i32, i32) {
    %c0_i32 = arith.constant 0 : i32
    %c0_i32_0 = arith.constant 0 : i32
    %c0_i32_1 = arith.constant 0 : i32
    return %arg0, %c0_i32, %c0_i32_0 : i32, i32, i32
  }
  func.func @transform_3(%arg0: i32) -> (i32, i32, i32) {
    %c0_i32 = arith.constant 0 : i32
    %c0_i32_0 = arith.constant 0 : i32
    %c0_i32_1 = arith.constant 0 : i32
    return %arg0, %c0_i32, %c0_i32_0 : i32, i32, i32
  }
  func.func @transform_4(%arg0: i32) -> (i32, i32) {
    %c0_i32 = arith.constant 0 : i32
    %c0_i32_0 = arith.constant 0 : i32
    return %arg0, %c0_i32 : i32, i32
  }
  func.func @transform_5(%arg0: i32) -> (i32, i32) {
    %c0_i32 = arith.constant 0 : i32
    %c0_i32_0 = arith.constant 0 : i32
    %c0_i32_1 = arith.constant 0 : i32
    return %c0_i32, %c0_i32_0 : i32, i32
  }
  func.func @transform_6(%arg0: i32) -> (i32, i32, i32) {
    %c0_i32 = arith.constant 0 : i32
    %c0_i32_0 = arith.constant 0 : i32
    %c0_i32_1 = arith.constant 0 : i32
    %c0_i32_2 = arith.constant 0 : i32
    return %c0_i32, %c0_i32_0, %c0_i32_1 : i32, i32, i32
  }
  func.func @transform_7(%arg0: i32) -> (i32, i32, i32) {
    %c0_i32 = arith.constant 0 : i32
    %c0_i32_0 = arith.constant 0 : i32
    %c0_i32_1 = arith.constant 0 : i32
    %c0_i32_2 = arith.constant 0 : i32
    return %c0_i32, %c0_i32_0, %c0_i32_1 : i32, i32, i32
  }
  func.func @transform_8(%arg0: i32) -> (i32, i32) {
    %c0_i32 = arith.constant 0 : i32
    %c0_i32_0 = arith.constant 0 : i32
    return %arg0, %c0_i32 : i32, i32
  }
  func.func @transform_9(%arg0: i32) -> (i32, i32) {
    %c0_i32 = arith.constant 0 : i32
    %c0_i32_0 = arith.constant 0 : i32
    return %arg0, %c0_i32 : i32, i32
  }
}

</mosaic_0001>

<llo_original>
// kernel: attention_forward.1
$region0: #{attention_forward.1}
  #allocation0 [shape = 'u32[]', space=smem, size = 0x4, offset = 0x4, fixed_abs, tag = 'smem constant byte address 0x4 - core index']
  #allocation1 [shape = 'u32[72,128]{1,0:T(1,128)}', space=vmem, size = 0x9000, scoped, tag = 'internal scratch']
  %s0 = inlined_call_operand.vmem [shape: f32[16,32], index: 0, kind: input, shape index: {}]
  %s1 = inlined_call_operand.vmem [shape: f32[2,8], index: 1, kind: input, shape index: {}]
  %s2 = inlined_call_operand.vmem [shape: f32[2,8,1], index: 2, kind: input, shape index: {}]
  %s3 = inlined_call_operand.vmem [shape: f32[2,1,32], index: 3, kind: input, shape index: {}]
  %s4 = inlined_call_operand.vmem [shape: s32[2,1], index: 4, kind: input, shape index: {}]
  %s5 = inlined_call_operand.vmem [shape: f32[32,32], index: 5, kind: input, shape index: {}]
  %s6 = inlined_call_operand.vmem [shape: f32[1,1,32], index: 6, kind: input, shape index: {}]
  %s7 = inlined_call_operand.vmem [shape: f32[1,1,32], index: 7, kind: input, shape index: {}]
  %s8 = inlined_call_operand.hbm [shape: f32[2,8], index: 8, kind: output, shape index: {0}]
  %s9 = inlined_call_operand.hbm [shape: f32[2,8], index: 9, kind: output, shape index: {1}]
  %10 = xla_tuple %s8, %s9
  %s11 = sld [smem:[#allocation0]]
  $region50: #{attention_forward.1} parent=0
    _
  %s13 = ssub.s32 1, %s11
  %s14 = scalar_select 0, %s13, %s11
  $region1: #{attention_forward.1} parent=0
    #allocation2 [shape = 'u8[1024]{0}', space=vmem, size = 0x400, scoped, tag = 'output window, operand 0, single buffered']
    #allocation3 [shape = 's32[1]{0}', space=sflag, size = 0x4, scoped, tag = 'scoped memory for attention_forward.1']
    #allocation4 [shape = 'u8[1024]{0}', space=vmem, size = 0x400, scoped, tag = 'output window, operand 1, single buffered']
    #allocation5 [shape = 's32[1]{0}', space=sflag, size = 0x4, scoped, tag = 'scoped memory for attention_forward.1']
    %15 = vsyncpa [#allocation3], 0
    %16 = vsyncpa [#allocation5], 0
    // Predicated region
    $region2: #{attention_forward.1} parent=1 // pred_check
      _
    $region3: #{attention_forward.1} parent=1 // pred_check_branch
      %18 = sbr.rel (0) target = $region5
    $region4: #{attention_forward.1} parent=1 // pred_region
      _
    $region5: #{attention_forward.1} parent=1 // pred_fallthru
      _
    // Predicated region
    $region6: #{attention_forward.1} parent=1 // pred_check
      _
    $region7: #{attention_forward.1} parent=1 // pred_check_branch
      %20 = sbr.rel (0) target = $region9
    $region8: #{attention_forward.1} parent=1 // pred_region
      _
    $region9: #{attention_forward.1} parent=1 // pred_fallthru
      _
    // Predicated region
    $region10: #{attention_forward.1} parent=1 // pred_check
      _
    $region11: #{attention_forward.1} parent=1 // pred_check_branch
      %22 = sbr.rel (0) target = $region13
    $region12: #{attention_forward.1} parent=1 // pred_region
      _
    $region13: #{attention_forward.1} parent=1 // pred_fallthru
      _
    // Predicated region
    $region14: #{attention_forward.1} parent=1 // pred_check
      _
    $region15: #{attention_forward.1} parent=1 // pred_check_branch
      %24 = sbr.rel (0) target = $region17
    $region16: #{attention_forward.1} parent=1 // pred_region
      _
    $region17: #{attention_forward.1} parent=1 // pred_fallthru
      _
    // Predicated region
    $region18: #{attention_forward.1} parent=1 // pred_check
      _
    $region19: #{attention_forward.1} parent=1 // pred_check_branch
      %26 = sbr.rel (0) target = $region21
    $region20: #{attention_forward.1} parent=1 // pred_region
      _
    $region21: #{attention_forward.1} parent=1 // pred_fallthru
      _
    // Predicated region
    $region22: #{attention_forward.1} parent=1 // pred_check
      _
    $region23: #{attention_forward.1} parent=1 // pred_check_branch
      %28 = sbr.rel (0) target = $region25
    $region24: #{attention_forward.1} parent=1 // pred_region
      _
    $region25: #{attention_forward.1} parent=1 // pred_fallthru
      _
    // Predicated region
    $region26: #{attention_forward.1} parent=1 // pred_check
      _
    $region27: #{attention_forward.1} parent=1 // pred_check_branch
      %30 = sbr.rel (0) target = $region29
    $region28: #{attention_forward.1} parent=1 // pred_region
      _
    $region29: #{attention_forward.1} parent=1 // pred_fallthru
      _
    // Predicated region
    $region30: #{attention_forward.1} parent=1 // pred_check
      _
    $region31: #{attention_forward.1} parent=1 // pred_check_branch
      %32 = sbr.rel (0) target = $region33
    $region32: #{attention_forward.1} parent=1 // pred_region
      _
    $region33: #{attention_forward.1} parent=1 // pred_fallthru
      _
    %v33 = vld [vmem:[%s0] sm:$0xff]
    %v34 = vld [vmem:[%s0 + $0x8] sm:$0xff]
    %v35 = vld [vmem:[%s5] sm:$0xff]
    %v36 = vld [vmem:[%s5 + $0x8] sm:$0xff]
    %v37 = vld [vmem:[%s5 + $0x10] sm:$0xff]
    %v38 = vld [vmem:[%s5 + $0x18] sm:$0xff]
    %vm39 = vcmask 261120
    %v41 = vsel %vm39, %v33, 0
    %v44 = vsel %vm39, %v34, 0
    %46 = vmatpush.msra.mxu0 0.0
    %47 = vmatpush.msra.mxu0 0.0
    %48 = vmatpush.msra.mxu0 0.0
    %49 = vmatpush.msra.mxu0 0.0
    %50 = vmatpush.msra.mxu0 0.0
    %51 = vmatpush.msra.mxu0 0.0
    %52 = vmatpush.msra.mxu0 0.0
    %53 = vmatpush.msra.mxu0 0.0
    %54 = vmatpush.msra.mxu0 0.0
    %55 = vmatpush.msra.mxu0 0.0
    %56 = vmatpush.msra.mxu0 0.0
    %57 = vmatpush.msra.mxu0 0.0
    %58 = vmatpush.msra.mxu0 %v38
    %59 = vmatpush.msra.mxu0 %v37
    %60 = vmatpush.msra.mxu0 %v36
    %61 = vmatpush.msra.mxu0 %v35
    %62 = vmatmul.f32.gmra.mxu0 %v41
    %v63 = vpop.f32.mrf.mxu0
    %v64 = vadd.f32 0.0, %v63
    %65 = vmatmul.f32.gmra.mxu0 %v44
    %v66 = vpop.f32.mrf.mxu0
    %v67 = vadd.f32 0.0, %v66
    %68 = vdwg.mxu0
    %v69 = vld [vmem:[%s3] sm:$0x1]
    %v70 = vld [vmem:[%s3 + $0x1] sm:$0x1]
    %v73 = vperm.slane %v69, 0
    %v74 = vperm.slane %v70, 0
    %v77 = vadd.f32 %v64, %v73
    %v78 = vadd.f32 %v67, %v74
    %v79 = vld [vmem:[%s2] sm:$0xff]
    %v80 = vld [vmem:[%s2 + $0x8] sm:$0xff]
    %v81 = vld [vmem:[%s6] sm:$0x1]
    %83 = vset.pattern.permute.xlu0 0
    %84 = vperm.xlu0 %83, %v79
    %v85 = vpop.permute.xlu0 %84
    %88 = vset.pattern.permute.xlu0 0
    %89 = vperm.xlu0 %88, %v80
    %v90 = vpop.permute.xlu0 %89
    %v93 = vperm.slane %v81, 0
    %v95 = vmul.f32 %v85, %v93
    %v96 = vmul.f32 %v90, %v93
    %v97 = vadd.f32 %v77, %v95
    %v98 = vadd.f32 %v78, %v96
    %v99 = vtanh.pop %v97
    %v100 = vtanh.pop %v98
    %v101 = vld [vmem:[%s7] sm:$0x1]
    %v103 = vperm.slane %v101, 0
    %v105 = vmul.f32 %v99, %v103
    %v106 = vmul.f32 %v100, %v103
    %v107 = vsel %vm39, %v105, 0.0
    %108 = vadd.xlane.f32.xlu0 %v107
    %v109 = vpop.xlane.xlu0 %108
    %v110 = vsel %vm39, %v106, 0.0
    %111 = vadd.xlane.f32.xlu0 %v110
    %v112 = vpop.xlane.xlu0 %111
    %v113 = vlaneseq
    %v114 = vand.u32 %v113, 127
    %v115 = vld [vmem:[%s4] sm:$0x3]
    %116 = vset.pattern.permute.xlu0 0
    %117 = vperm.xlu0 %116, %v115
    %v118 = vpop.permute.xlu0 %117
    %vm119 = vcmp.ge.s32.totalorder %v114, %v118
    %v122 = vperm.slane %v109, %v114
    %v123 = vperm.slane %v112, %v114
    %vm124 = vcmask 1041409
    %v125 = vsel %vm124, %v123, %v122
    %v127 = vsel %vm119, -inf, %v125
    %vm128 = vcmask 58368
    %v129 = vsel %vm128, %v127, -inf
    %130 = vmax.xlane.f32.xlu0 %v129
    %v131 = vpop.xlane.xlu0 %130
    %v132 = vsub.f32 %v127, %v131
    %v133 = vmul.f32 %v132, 1.442695
    %v134 = vpow.pop %v133
    %v135 = vsel %vm128, %v134, 0.0
    %136 = vadd.xlane.f32.xlu0 %v135
    %v137 = vpop.xlane.xlu0 %136
    %v138 = vrcp.pop %v137
    %v139 = vmul.f32 %v134, %v138
    %140 = vst.msk [vmem:[#allocation2] sm:$0x3] %vm128, %v139
    %v141 = vld [vmem:[%s1] sm:$0x3]
    %v142 = vadd.f32 %v141, %v139
    %143 = vst.msk [vmem:[#allocation4] sm:$0x3] %vm128, %v142
    // Predicated region
    $region34: #{attention_forward.1} parent=1 // pred_check
      _
    $region35: #{attention_forward.1} parent=1 // pred_check_branch
      %145 = sbr.rel (0) target = $region37
    $region36: #{attention_forward.1} parent=1 // pred_region
      %147 = vsyncadd [#allocation3], 0
      %s149 = sshll.u32 [#allocation2], 4
      %s150 = int_to_ptr.vmem [resolvable:$true] %s149
      %s151 = sshll.u32 %s8, 4
      %s152 = int_to_ptr.hbm [resolvable:$true] %s151
      %154 = dma.vmem_to_hbm [thread:$0]  %s150, 32, %s152, [#allocation3]
    $region37: #{attention_forward.1} parent=1 // pred_fallthru
      _
    // Predicated region
    $region38: #{attention_forward.1} parent=1 // pred_check
      _
    $region39: #{attention_forward.1} parent=1 // pred_check_branch
      %156 = sbr.rel (0) target = $region41
    $region40: #{attention_forward.1} parent=1 // pred_region
      %158 = vsyncadd [#allocation5], 0
      %s160 = sshll.u32 [#allocation4], 4
      %s161 = int_to_ptr.vmem [resolvable:$true] %s160
      %s162 = sshll.u32 %s9, 4
      %s163 = int_to_ptr.hbm [resolvable:$true] %s162
      %165 = dma.vmem_to_hbm [thread:$0]  %s161, 32, %s163, [#allocation5]
    $region41: #{attention_forward.1} parent=1 // pred_fallthru
      _
    // Predicated region
    $region42: #{attention_forward.1} parent=1 // pred_check
      _
    $region43: #{attention_forward.1} parent=1 // pred_check_branch
      %167 = sbr.rel (0) target = $region45
    $region44: #{attention_forward.1} parent=1 // pred_region
      %169 = dma.done [#allocation3], 32
    $region45: #{attention_forward.1} parent=1 // pred_fallthru
      _
    // Predicated region
    $region46: #{attention_forward.1} parent=1 // pred_check
      _
    $region47: #{attention_forward.1} parent=1 // pred_check_branch
      %171 = sbr.rel (0) target = $region49
    $region48: #{attention_forward.1} parent=1 // pred_region
      %173 = dma.done [#allocation5], 32
    $region49: #{attention_forward.1} parent=1 // pred_fallthru
      _
    %174 = vsyncpa [#allocation3], 1
    %175 = vsyncpa [#allocation5], 1

</llo_original>
